<compile_context>
chip_gen: v7x
topology: tpu7x:2x2x1
jax: 0.10.0
libtpu: 0.0.40
codegen_flags: <defaults>
</compile_context>

<pallas_src>
import functools

import jax
import jax.numpy as jnp
from jax import lax
from jax.experimental import pallas as pl
from jax.experimental.pallas import tpu as pltpu


# --------------------------------------------------------------------------- #
# Kernel
# --------------------------------------------------------------------------- #
def _double_conv_kernel(x_ref, w1_ref, b1_ref, w2_ref, b2_ref, o_ref, *, H):
    # x_ref : (Nb, H, W*Cin)          f32   Nb images, W and C folded into lanes
    # w1_ref: (3*W*Cin,  W*Cmid)      bf16  stacked banded weights (BN1 scale folded in)
    # b1_ref: (1, W*Cmid)             f32   BN1 shift, tiled over W
    # w2_ref: (3*W*Cmid, W*Cout)      bf16  stacked banded weights (BN2 scale folded in)
    # b2_ref: (1, W*Cout)             f32
    # o_ref : (Nb, H, W*Cout)         f32   lane-dense output tile
    Nb, _, Lin = x_ref.shape
    M = Nb * H

    x = x_ref[...].reshape(M, Lin)                       # (M, W*Cin) f32

    # Per-row position within its image; masks the H-direction zero padding and the
    # boundaries between the Nb images packed into this block.
    row = lax.broadcasted_iota(jnp.int32, (M, 1), 0)
    rmod = row % H
    is_top = rmod == 0
    is_bot = rmod == (H - 1)

    def conv3x3(a_f32, w_ref):
        # up[i] = a[i-1], dn[i] = a[i+1]; rows outside the image are zeroed (padding).
        up = jnp.where(is_top, 0.0, pltpu.roll(a_f32, 1, axis=0))
        dn = jnp.where(is_bot, 0.0, pltpu.roll(a_f32, M - 1, axis=0))
        lhs = jnp.concatenate(
            [up.astype(jnp.bfloat16),
             a_f32.astype(jnp.bfloat16),
             dn.astype(jnp.bfloat16)], axis=-1)          # (M, 3*W*Ci) bf16
        # Single MXU matmul per conv; ky-reduction happens inside the contraction.
        return jnp.dot(lhs, w_ref[...], preferred_element_type=jnp.float32)

    # conv1 + BN1 (scale folded into w1, shift here) + ReLU
    h = jnp.maximum(conv3x3(x, w1_ref) + b1_ref[...], 0.0)     # (M, W*Cmid) f32
    # conv2 + BN2 + ReLU
    y = jnp.maximum(conv3x3(h, w2_ref) + b2_ref[...], 0.0)     # (M, W*Cout) f32
    o_ref[...] = y.reshape(Nb, H, -1).astype(o_ref.dtype)


# --------------------------------------------------------------------------- #
# Host-side weight repacking
# --------------------------------------------------------------------------- #
def _stacked_banded_weights(w_hwio, W, scale):
    """(3, 3, Ci, Co) HWIO taps -> (3*W*Ci, W*Co) stacked banded matmul weights.

    M_ky[wi*Ci+ci, wo*Co+co] = w[ky, wi-wo+1, ci, co] for |wi-wo| <= 1 (else 0), so
        out_row[i] = [x[i-1], x[i], x[i+1]] @ stack([M_0; M_1; M_2])
    reproduces the 3x3 conv with zero padding along W.  The BN scale is folded into
    the output columns before the bf16 cast.
    """
    KH, KW, Ci, Co = w_hwio.shape
    diff = jnp.arange(W)[:, None] - jnp.arange(W)[None, :]        # wi - wo
    mats = []
    for ky in range(KH):
        m = jnp.zeros((W, Ci, W, Co), jnp.float32)
        for kx in range(KW):
            sel = (diff == (kx - 1)).astype(jnp.float32)
            m = m + sel[:, None, :, None] * w_hwio[ky, kx][None, :, None, :]
        mats.append(m.reshape(W * Ci, W * Co))
    stacked = jnp.concatenate(mats, axis=0)                       # (3*W*Ci, W*Co)
    s_tiled = jnp.tile(scale.astype(jnp.float32), W)[None, :]     # (1, W*Co)
    return (stacked * s_tiled).astype(jnp.bfloat16)


def _pick_batch_block(N, H):
    """Largest divisor of N that targets >=128 MXU rows but keeps >=2 grid steps."""
    target = max(1, 128 // H)
    if N >= 2:
        target = min(target, max(1, N // 2))
    nb = 1
    for d in range(1, min(target, N) + 1):
        if N % d == 0:
            nb = d
    return nb


# --------------------------------------------------------------------------- #
# Pallas wrapper (NHWC is the native layout; keep NHWC end-to-end in a real model)
# --------------------------------------------------------------------------- #
def double_conv_pallas(x_nhwc, w1_hwio, s1, b1, w2_hwio, s2, b2):
    N, H, W, Cin = x_nhwc.shape
    Cmid = w1_hwio.shape[3]
    Cout = w2_hwio.shape[3]

    w1s = _stacked_banded_weights(w1_hwio, W, s1)                 # (3*W*Cin,  W*Cmid)
    w2s = _stacked_banded_weights(w2_hwio, W, s2)                 # (3*W*Cmid, W*Cout)
    b1t = jnp.tile(b1.astype(jnp.float32), W)[None, :]            # (1, W*Cmid)
    b2t = jnp.tile(b2.astype(jnp.float32), W)[None, :]            # (1, W*Cout)

    # Fold W into the lane axis (contiguous reshape, no halo pad).
    x2d = x_nhwc.reshape(N, H, W * Cin).astype(jnp.float32)

    Nb = _pick_batch_block(N, H)
    G = N // Nb

    grid_spec = pltpu.PrefetchScalarGridSpec(
        num_scalar_prefetch=0,
        grid=(G,),
        in_specs=[
            pl.BlockSpec((Nb, H, W * Cin), lambda g: (g, 0, 0)),
            # Constant index_map -> weights stay VMEM-resident across grid steps.
            pl.BlockSpec((3 * W * Cin, W * Cmid), lambda g: (0, 0)),
            pl.BlockSpec((1, W * Cmid), lambda g: (0, 0)),
            pl.BlockSpec((3 * W * Cmid, W * Cout), lambda g: (0, 0)),
            pl.BlockSpec((1, W * Cout), lambda g: (0, 0)),
        ],
        out_specs=pl.BlockSpec((Nb, H, W * Cout), lambda g: (g, 0, 0)),
    )

    y2d = pl.pallas_call(
        functools.partial(_double_conv_kernel, H=H),
        out_shape=jax.ShapeDtypeStruct((N, H, W * Cout), jnp.float32),
        grid_spec=grid_spec,
        compiler_params=pltpu.CompilerParams(
            dimension_semantics=("parallel",)),
    )(x2d, w1s, b1t, w2s, b2t)

    return y2d.reshape(N, H, W, Cout)


@jax.jit
def double_conv_nchw(x_nchw, params):
    """Matches DoubleConv.forward (inference-mode BN) on a PyTorch-style NCHW input.

    The NCHW<->NHWC transposes exist only for the PyTorch-layout test harness; in a
    real JAX model keep NHWC end-to-end and call double_conv_pallas directly.
    """
    w1_hwio, s1, b1, w2_hwio, s2, b2 = params
    x_nhwc = jnp.transpose(x_nchw, (0, 2, 3, 1))
    y_nhwc = double_conv_pallas(x_nhwc, w1_hwio, s1, b1, w2_hwio, s2, b2)
    return jnp.transpose(y_nhwc, (0, 3, 1, 2))


# --------------------------------------------------------------------------- #
# Params / reference
# --------------------------------------------------------------------------- #
def make_params(key, in_channel, out_channel, mid_channel=None):
    if not mid_channel:
        mid_channel = out_channel
    eps = 1e-5
    k1, k2, k3, k4, k5, k6 = jax.random.split(key, 6)

    # Conv weights: PyTorch OIHW -> HWIO.
    w1_oihw = jax.random.normal(k1, (mid_channel, in_channel, 3, 3), jnp.float32) * 0.1
    w2_oihw = jax.random.normal(k2, (out_channel, mid_channel, 3, 3), jnp.float32) * 0.1
    w1_hwio = jnp.transpose(w1_oihw, (2, 3, 1, 0))
    w2_hwio = jnp.transpose(w2_oihw, (2, 3, 1, 0))

    # BN params, inference-mode folding (scale/shift).
    gamma1 = 1.0 + 0.1 * jax.random.normal(k3, (mid_channel,), jnp.float32)
    beta1 = 0.1 * jax.random.normal(k4, (mid_channel,), jnp.float32)
    mean1 = jnp.zeros((mid_channel,), jnp.float32)
    var1 = jnp.ones((mid_channel,), jnp.float32)
    gamma2 = 1.0 + 0.1 * jax.random.normal(k5, (out_channel,), jnp.float32)
    beta2 = 0.1 * jax.random.normal(k6, (out_channel,), jnp.float32)
    mean2 = jnp.zeros((out_channel,), jnp.float32)
    var2 = jnp.ones((out_channel,), jnp.float32)

    s1 = gamma1 / jnp.sqrt(var1 + eps)
    b1 = beta1 - mean1 * s1
    s2 = gamma2 / jnp.sqrt(var2 + eps)
    b2 = beta2 - mean2 * s2
    return (w1_hwio, s1, b1, w2_hwio, s2, b2)


def reference_nchw(x_nchw, params):
    """Pure-f32 JAX reference (true DoubleConv semantics, inference-mode BN)."""
    w1, s1, b1, w2, s2, b2 = params
    x = jnp.transpose(x_nchw, (0, 2, 3, 1))

    def conv(v, w):
        return lax.conv_general_dilated(
            v, w, window_strides=(1, 1), padding=((1, 1), (1, 1)),
            dimension_numbers=("NHWC", "HWIO", "NHWC"),
            precision=lax.Precision.HIGHEST)

    h = jnp.maximum(conv(x, w1) * s1 + b1, 0.0)
    y = jnp.maximum(conv(h, w2) * s2 + b2, 0.0)
    return jnp.transpose(y, (0, 3, 1, 2))


# --------------------------------------------------------------------------- #
if __name__ == "__main__":
    N, Cin, H, W = 2, 4, 16, 16
    Cout = 8

    key = jax.random.PRNGKey(0)
    kx, kp = jax.random.split(key)
    x = jax.random.normal(kx, (N, Cin, H, W), jnp.float32)   # NCHW, like PyTorch

    params = make_params(kp, Cin, Cout)

    y = double_conv_nchw(x, params)
    y = jax.block_until_ready(y)

    y_ref = reference_nchw(x, params)
    assert y.shape == (N, Cout, H, W)
    max_err = float(jnp.max(jnp.abs(y - y_ref)))
    # bf16 MXU operands vs a pure-f32 reference -> small quantization error.
    assert jnp.allclose(y, y_ref, atol=3e-2, rtol=3e-2), max_err

    print("KERNEL_OK")
</pallas_src>

<mosaic_0001>
module attributes {stable_mosaic.version = 11 : i64} {
  func.func @_double_conv_kernel(%arg0: i32, %arg1: memref<1x16x64xf32, #tpu.memory_space<vmem>>, %arg2: memref<192x128xbf16, #tpu.memory_space<vmem>>, %arg3: memref<1x128xf32, #tpu.memory_space<vmem>>, %arg4: memref<384x128xbf16, #tpu.memory_space<vmem>>, %arg5: memref<1x128xf32, #tpu.memory_space<vmem>>, %arg6: memref<1x16x128xf32, #tpu.memory_space<vmem>>) attributes {dimension_semantics = [#tpu.dimension_semantics<parallel>], iteration_bounds = array<i64: 2>, scalar_prefetch = 0 : i64, scratch_operands = 0 : i64, tpu.core_type = #tpu.core_type<tc>, window_params = [{transform_indices = @transform_0, window_bounds = array<i64: 1, 16, 64>}, {pipeline_mode = #tpu.pipeline_mode<synchronous>, transform_indices = @transform_1, window_bounds = array<i64: 192, 128>}, {pipeline_mode = #tpu.pipeline_mode<synchronous>, transform_indices = @transform_2, window_bounds = array<i64: 1, 128>}, {pipeline_mode = #tpu.pipeline_mode<synchronous>, transform_indices = @transform_3, window_bounds = array<i64: 384, 128>}, {pipeline_mode = #tpu.pipeline_mode<synchronous>, transform_indices = @transform_4, window_bounds = array<i64: 1, 128>}, {transform_indices = @transform_5, window_bounds = array<i64: 1, 16, 128>}]} {
    %c0 = arith.constant 0 : index
    %c0_0 = arith.constant 0 : index
    %c0_1 = arith.constant 0 : index
    %0 = vector.load %arg1[%c0, %c0_0, %c0_1] : memref<1x16x64xf32, #tpu.memory_space<vmem>>, vector<1x16x64xf32>
    %1 = vector.shape_cast %0 : vector<1x16x64xf32> to vector<16x64xf32>
    %2 = tpu.iota {dimensions = array<i32: 0>} : vector<16x1xi32>
    %c16_i32 = arith.constant 16 : i32
    %c0_i32 = arith.constant 0 : i32
    %3 = arith.cmpi eq, %c16_i32, %c0_i32 : i32
    %c1_i32 = arith.constant 1 : i32
    %4 = arith.select %3, %c1_i32, %c16_i32 : i32
    %5 = vector.broadcast %4 : i32 to vector<16x1xi32>
    %6 = arith.remsi %2, %5 : vector<16x1xi32>
    %c0_i32_2 = arith.constant 0 : i32
    %7 = vector.broadcast %c0_i32_2 : i32 to vector<16x1xi32>
    %8 = arith.cmpi ne, %6, %7 : vector<16x1xi32>
    %c0_i32_3 = arith.constant 0 : i32
    %9 = vector.broadcast %c0_i32_3 : i32 to vector<16x1xi32>
    %10 = arith.cmpi slt, %6, %9 : vector<16x1xi32>
    %c0_i32_4 = arith.constant 0 : i32
    %11 = arith.cmpi slt, %4, %c0_i32_4 : i32
    %12 = vector.broadcast %11 : i1 to vector<16x1xi1>
    %13 = vector.broadcast %12 : vector<16x1xi1> to vector<16x1xi1>
    %14 = arith.xori %10, %13 : vector<16x1xi1>
    %15 = arith.andi %14, %8 : vector<16x1xi1>
    %16 = vector.broadcast %4 : i32 to vector<16x1xi32>
    %17 = arith.addi %6, %16 : vector<16x1xi32>
    %18 = arith.select %15, %17, %6 : vector<16x1xi1>, vector<16x1xi32>
    %c0_i32_5 = arith.constant 0 : i32
    %19 = vector.broadcast %c0_i32_5 : i32 to vector<16x1xi32>
    %20 = arith.cmpi eq, %18, %19 : vector<16x1xi32>
    %c15_i32 = arith.constant 15 : i32
    %21 = vector.broadcast %c15_i32 : i32 to vector<16x1xi32>
    %22 = arith.cmpi eq, %18, %21 : vector<16x1xi32>
    %c1_i32_6 = arith.constant 1 : i32
    %23 = tpu.dynamic_rotate %1 by %c1_i32_6 dim 0 : vector<16x64xf32>, i32 -> vector<16x64xf32>
    %cst = arith.constant 0.000000e+00 : f32
    %24 = vector.shape_cast %20 : vector<16x1xi1> to vector<16x1xi1>
    %25 = vector.broadcast %24 : vector<16x1xi1> to vector<16x64xi1>
    %26 = vector.broadcast %cst : f32 to vector<16x64xf32>
    %27 = arith.select %25, %26, %23 : vector<16x64xi1>, vector<16x64xf32>
    %c15_i32_7 = arith.constant 15 : i32
    %28 = tpu.dynamic_rotate %1 by %c15_i32_7 dim 0 : vector<16x64xf32>, i32 -> vector<16x64xf32>
    %cst_8 = arith.constant 0.000000e+00 : f32
    %29 = vector.shape_cast %22 : vector<16x1xi1> to vector<16x1xi1>
    %30 = vector.broadcast %29 : vector<16x1xi1> to vector<16x64xi1>
    %31 = vector.broadcast %cst_8 : f32 to vector<16x64xf32>
    %32 = arith.select %30, %31, %28 : vector<16x64xi1>, vector<16x64xf32>
    %33 = arith.truncf %27 : vector<16x64xf32> to vector<16x64xbf16>
    %34 = arith.truncf %1 : vector<16x64xf32> to vector<16x64xbf16>
    %35 = arith.truncf %32 : vector<16x64xf32> to vector<16x64xbf16>
    %36 = tpu.concatenate %33, %34, %35 in 1 : vector<16x64xbf16>, vector<16x64xbf16>, vector<16x64xbf16> -> vector<16x192xbf16>
    %c0_9 = arith.constant 0 : index
    %c0_10 = arith.constant 0 : index
    %37 = vector.load %arg2[%c0_9, %c0_10] : memref<192x128xbf16, #tpu.memory_space<vmem>>, vector<192x128xbf16>
    %cst_11 = arith.constant dense<0.000000e+00> : vector<16x128xf32>
    %38 = tpu.matmul %36, %37, %cst_11 {dimension_numbers = #tpu.dot_dimension_numbers<[1], [0], [0], [1], [0, 0, 1, 1], [], []>} : vector<16x192xbf16>, vector<192x128xbf16>, vector<16x128xf32> -> vector<16x128xf32>
    %c0_12 = arith.constant 0 : index
    %c0_13 = arith.constant 0 : index
    %39 = vector.load %arg3[%c0_12, %c0_13] : memref<1x128xf32, #tpu.memory_space<vmem>>, vector<1x128xf32>
    %40 = vector.broadcast %39 : vector<1x128xf32> to vector<16x128xf32>
    %41 = arith.addf %38, %40 : vector<16x128xf32>
    %cst_14 = arith.constant 0.000000e+00 : f32
    %42 = vector.broadcast %cst_14 : f32 to vector<16x128xf32>
    %43 = arith.maximumf %41, %42 : vector<16x128xf32>
    %c1_i32_15 = arith.constant 1 : i32
    %44 = tpu.dynamic_rotate %43 by %c1_i32_15 dim 0 : vector<16x128xf32>, i32 -> vector<16x128xf32>
    %cst_16 = arith.constant 0.000000e+00 : f32
    %45 = vector.shape_cast %20 : vector<16x1xi1> to vector<16x1xi1>
    %46 = vector.broadcast %45 : vector<16x1xi1> to vector<16x128xi1>
    %47 = vector.broadcast %cst_16 : f32 to vector<16x128xf32>
    %48 = arith.select %46, %47, %44 : vector<16x128xi1>, vector<16x128xf32>
    %c15_i32_17 = arith.constant 15 : i32
    %49 = tpu.dynamic_rotate %43 by %c15_i32_17 dim 0 : vector<16x128xf32>, i32 -> vector<16x128xf32>
    %cst_18 = arith.constant 0.000000e+00 : f32
    %50 = vector.shape_cast %22 : vector<16x1xi1> to vector<16x1xi1>
    %51 = vector.broadcast %50 : vector<16x1xi1> to vector<16x128xi1>
    %52 = vector.broadcast %cst_18 : f32 to vector<16x128xf32>
    %53 = arith.select %51, %52, %49 : vector<16x128xi1>, vector<16x128xf32>
    %54 = arith.truncf %48 : vector<16x128xf32> to vector<16x128xbf16>
    %55 = arith.truncf %43 : vector<16x128xf32> to vector<16x128xbf16>
    %56 = arith.truncf %53 : vector<16x128xf32> to vector<16x128xbf16>
    %57 = tpu.concatenate %54, %55, %56 in 1 : vector<16x128xbf16>, vector<16x128xbf16>, vector<16x128xbf16> -> vector<16x384xbf16>
    %c0_19 = arith.constant 0 : index
    %c0_20 = arith.constant 0 : index
    %58 = vector.load %arg4[%c0_19, %c0_20] : memref<384x128xbf16, #tpu.memory_space<vmem>>, vector<384x128xbf16>
    %cst_21 = arith.constant dense<0.000000e+00> : vector<16x128xf32>
    %59 = tpu.matmul %57, %58, %cst_21 {dimension_numbers = #tpu.dot_dimension_numbers<[1], [0], [0], [1], [0, 0, 1, 1], [], []>} : vector<16x384xbf16>, vector<384x128xbf16>, vector<16x128xf32> -> vector<16x128xf32>
    %c0_22 = arith.constant 0 : index
    %c0_23 = arith.constant 0 : index
    %60 = vector.load %arg5[%c0_22, %c0_23] : memref<1x128xf32, #tpu.memory_space<vmem>>, vector<1x128xf32>
    %61 = vector.broadcast %60 : vector<1x128xf32> to vector<16x128xf32>
    %62 = arith.addf %59, %61 : vector<16x128xf32>
    %cst_24 = arith.constant 0.000000e+00 : f32
    %63 = vector.broadcast %cst_24 : f32 to vector<16x128xf32>
    %64 = arith.maximumf %62, %63 : vector<16x128xf32>
    %65 = vector.shape_cast %64 : vector<16x128xf32> to vector<1x16x128xf32>
    %c0_25 = arith.constant 0 : index
    %c0_26 = arith.constant 0 : index
    %c0_27 = arith.constant 0 : index
    %66 = vector.load %arg6[%c0_25, %c0_26, %c0_27] : memref<1x16x128xf32, #tpu.memory_space<vmem>>, vector<1x16x128xf32>
    tpu.vector_store %arg6[%c0_25, %c0_26, %c0_27], %65 {strides = array<i32>} : memref<1x16x128xf32, #tpu.memory_space<vmem>>, vector<1x16x128xf32>,
    return
  }
  func.func @transform_0(%arg0: i32) -> (i32, i32, i32) {
    %c0_i32 = arith.constant 0 : i32
    %c0_i32_0 = arith.constant 0 : i32
    %c0_i32_1 = arith.constant 0 : i32
    return %arg0, %c0_i32, %c0_i32_0 : i32, i32, i32
  }
  func.func @transform_1(%arg0: i32) -> (i32, i32) {
    %c0_i32 = arith.constant 0 : i32
    %c0_i32_0 = arith.constant 0 : i32
    %c0_i32_1 = arith.constant 0 : i32
    return %c0_i32, %c0_i32_0 : i32, i32
  }
  func.func @transform_2(%arg0: i32) -> (i32, i32) {
    %c0_i32 = arith.constant 0 : i32
    %c0_i32_0 = arith.constant 0 : i32
    %c0_i32_1 = arith.constant 0 : i32
    return %c0_i32, %c0_i32_0 : i32, i32
  }
  func.func @transform_3(%arg0: i32) -> (i32, i32) {
    %c0_i32 = arith.constant 0 : i32
    %c0_i32_0 = arith.constant 0 : i32
    %c0_i32_1 = arith.constant 0 : i32
    return %c0_i32, %c0_i32_0 : i32, i32
  }
  func.func @transform_4(%arg0: i32) -> (i32, i32) {
    %c0_i32 = arith.constant 0 : i32
    %c0_i32_0 = arith.constant 0 : i32
    %c0_i32_1 = arith.constant 0 : i32
    return %c0_i32, %c0_i32_0 : i32, i32
  }
  func.func @transform_5(%arg0: i32) -> (i32, i32, i32) {
    %c0_i32 = arith.constant 0 : i32
    %c0_i32_0 = arith.constant 0 : i32
    %c0_i32_1 = arith.constant 0 : i32
    return %arg0, %c0_i32, %c0_i32_0 : i32, i32, i32
  }
}

</mosaic_0001>

<llo_original>
// kernel: tile.28
$region0: #{tile.28}
  #allocation0 [shape = 's32[1]{0}', space=sflag, size = 0x4, scoped, tag = 'scoped memory for tile.28']
  %s0 = inlined_call_operand.vmem [shape: f32[8], index: 0, kind: input, shape index: {}]
  %s1 = inlined_call_operand.vmem [shape: f32[16,8], index: 1, kind: output, shape index: {}]
  // Predicated region
  $region2: #{tile.28} parent=0 // pred_check
    _
  $region3: #{tile.28} parent=0 // pred_check_branch
    %3 = sbr.rel (0) target = $region5
  $region4: #{tile.28} parent=0 // pred_region
    _
  $region5: #{tile.28} parent=0 // pred_fallthru
    _
  %v4 = vld [vmem:[%s0] ss:$0 sm:$0xff]
  %5 = vst [vmem:[%s1] sm:$0xff] %v4
  %s6 = scalar_lea.vmem %s1, 8
  %7 = vst [vmem:[%s6] sm:$0xff] %v4

// kernel: mul.265
$region0: #{mul.265}
  %s0 = inlined_call_operand.vmem [shape: f32[16,8], index: 0, kind: input, shape index: {}]
  %s1 = inlined_call_operand.vmem [shape: f32[128], index: 1, kind: output, shape index: {}]
  $region1: #{mul.265} parent=0
    #allocation0 [shape = 'u8[4096]{0}', space=vmem, size = 0x1000, scoped, tag = 'scoped mem for output reshape']
    %v2 = vld [vmem:[%s0] sm:$0x1]
    %vm3 = vcmask 64512
    %4 = vst.msk [vmem:[#allocation0] sm:$0x1] %vm3, %v2
    %s5 = scalar_lea.vmem %s0, 15
    %v6 = vld [vmem:[%s5] sm:$0x1]
    %7 = vrot.lane.b32.xlu0 %v6, 120
    %v8 = vpop.permute.xlu0 %7
    %vm9 = vcmask 1048512
    %10 = vst.msk [vmem:[#allocation0] sm:$0x1] %vm9, %v8
    %s11 = scalar_lea.vmem %s0, 14
    %v12 = vld [vmem:[%s11] sm:$0x1]
    %13 = vrot.lane.b32.xlu0 %v12, 112
    %v14 = vpop.permute.xlu0 %13
    %vm15 = vcmask 982912
    %16 = vst.msk [vmem:[#allocation0] sm:$0x1] %vm15, %v14
    %s17 = scalar_lea.vmem %s0, 13
    %v18 = vld [vmem:[%s17] sm:$0x1]
    %19 = vrot.lane.b32.xlu0 %v18, 104
    %v20 = vpop.permute.xlu0 %19
    %vm21 = vcmask 917312
    %22 = vst.msk [vmem:[#allocation0] sm:$0x1] %vm21, %v20
    %s23 = scalar_lea.vmem %s0, 12
    %v24 = vld [vmem:[%s23] sm:$0x1]
    %25 = vrot.lane.b32.xlu0 %v24, 96
    %v26 = vpop.permute.xlu0 %25
    %vm27 = vcmask 851712
    %28 = vst.msk [vmem:[#allocation0] sm:$0x1] %vm27, %v26
    %s29 = scalar_lea.vmem %s0, 11
    %v30 = vld [vmem:[%s29] sm:$0x1]
    %31 = vrot.lane.b32.xlu0 %v30, 88
    %v32 = vpop.permute.xlu0 %31
    %vm33 = vcmask 786112
    %34 = vst.msk [vmem:[#allocation0] sm:$0x1] %vm33, %v32
    %s35 = scalar_lea.vmem %s0, 10
    %v36 = vld [vmem:[%s35] sm:$0x1]
    %37 = vrot.lane.b32.xlu0 %v36, 80
    %v38 = vpop.permute.xlu0 %37
    %vm39 = vcmask 720512
    %40 = vst.msk [vmem:[#allocation0] sm:$0x1] %vm39, %v38
    %s41 = scalar_lea.vmem %s0, 9
    %v42 = vld [vmem:[%s41] sm:$0x1]
    %43 = vrot.lane.b32.xlu0 %v42, 72
    %v44 = vpop.permute.xlu0 %43
    %vm45 = vcmask 654912
    %46 = vst.msk [vmem:[#allocation0] sm:$0x1] %vm45, %v44
    %s47 = scalar_lea.vmem %s0, 8
    %v48 = vld [vmem:[%s47] sm:$0x1]
    %49 = vrot.lane.b32.xlu0 %v48, 64
    %v50 = vpop.permute.xlu0 %49
    %vm51 = vcmask 589312
    %52 = vst.msk [vmem:[#allocation0] sm:$0x1] %vm51, %v50
    %s53 = scalar_lea.vmem %s0, 7
    %v54 = vld [vmem:[%s53] sm:$0x1]
    %55 = vrot.lane.b32.xlu0 %v54, 56
    %v56 = vpop.permute.xlu0 %55
    %vm57 = vcmask 523712
    %58 = vst.msk [vmem:[#allocation0] sm:$0x1] %vm57, %v56
    %s59 = scalar_lea.vmem %s0, 6
    %v60 = vld [vmem:[%s59] sm:$0x1]
    %61 = vrot.lane.b32.xlu0 %v60, 48
    %v62 = vpop.permute.xlu0 %61
    %vm63 = vcmask 458112
    %64 = vst.msk [vmem:[#allocation0] sm:$0x1] %vm63, %v62
    %s65 = scalar_lea.vmem %s0, 5
    %v66 = vld [vmem:[%s65] sm:$0x1]
    %67 = vrot.lane.b32.xlu0 %v66, 40
    %v68 = vpop.permute.xlu0 %67
    %vm69 = vcmask 392512
    %70 = vst.msk [vmem:[#allocation0] sm:$0x1] %vm69, %v68
    %s71 = scalar_lea.vmem %s0, 4
    %v72 = vld [vmem:[%s71] sm:$0x1]
    %73 = vrot.lane.b32.xlu0 %v72, 32
    %v74 = vpop.permute.xlu0 %73
    %vm75 = vcmask 326912
    %76 = vst.msk [vmem:[#allocation0] sm:$0x1] %vm75, %v74
    %s77 = scalar_lea.vmem %s0, 3
    %v78 = vld [vmem:[%s77] sm:$0x1]
    %79 = vrot.lane.b32.xlu0 %v78, 24
    %v80 = vpop.permute.xlu0 %79
    %vm81 = vcmask 261312
    %82 = vst.msk [vmem:[#allocation0] sm:$0x1] %vm81, %v80
    %s83 = scalar_lea.vmem %s0, 2
    %v84 = vld [vmem:[%s83] sm:$0x1]
    %85 = vrot.lane.b32.xlu0 %v84, 16
    %v86 = vpop.permute.xlu0 %85
    %vm87 = vcmask 195712
    %88 = vst.msk [vmem:[#allocation0] sm:$0x1] %vm87, %v86
    %s89 = scalar_lea.vmem %s0, 1
    %v90 = vld [vmem:[%s89] sm:$0x1]
    %91 = vrot.lane.b32.xlu0 %v90, 8
    %v92 = vpop.permute.xlu0 %91
    %vm93 = vcmask 130112
    %94 = vst.msk [vmem:[#allocation0] sm:$0x1] %vm93, %v92
    %s96 = sshllo.u32 0, 1
    %v98 = vld [vmem:[#allocation0] sm:%s96]
    %s99 = sshllo.u32 0, 1
    %100 = vst [vmem:[%s1] sm:%s99] %v98

// kernel: tile.34
$region0: #{tile.34}
  %s0 = inlined_call_operand.vmem [shape: f32[16,8], index: 0, kind: input, shape index: {}]
  %s1 = inlined_call_operand.vmem [shape: f32[1,128], index: 1, kind: output, shape index: {}]
  $region1: #{tile.34} parent=0
    #allocation0 [shape = 'u8[4096]{0}', space=vmem, size = 0x1000, scoped, tag = 'scoped mem for output reshape']
    %v2 = vld [vmem:[%s0] sm:$0x1]
    %vm3 = vcmask 64512
    %4 = vst.msk [vmem:[#allocation0] sm:$0x1] %vm3, %v2
    %s5 = scalar_lea.vmem %s0, 15
    %v6 = vld [vmem:[%s5] sm:$0x1]
    %7 = vrot.lane.b32.xlu0 %v6, 120
    %v8 = vpop.permute.xlu0 %7
    %vm9 = vcmask 1048512
    %10 = vst.msk [vmem:[#allocation0] sm:$0x1] %vm9, %v8
    %s11 = scalar_lea.vmem %s0, 14
    %v12 = vld [vmem:[%s11] sm:$0x1]
    %13 = vrot.lane.b32.xlu0 %v12, 112
    %v14 = vpop.permute.xlu0 %13
    %vm15 = vcmask 982912
    %16 = vst.msk [vmem:[#allocation0] sm:$0x1] %vm15, %v14
    %s17 = scalar_lea.vmem %s0, 13
    %v18 = vld [vmem:[%s17] sm:$0x1]
    %19 = vrot.lane.b32.xlu0 %v18, 104
    %v20 = vpop.permute.xlu0 %19
    %vm21 = vcmask 917312
    %22 = vst.msk [vmem:[#allocation0] sm:$0x1] %vm21, %v20
    %s23 = scalar_lea.vmem %s0, 12
    %v24 = vld [vmem:[%s23] sm:$0x1]
    %25 = vrot.lane.b32.xlu0 %v24, 96
    %v26 = vpop.permute.xlu0 %25
    %vm27 = vcmask 851712
    %28 = vst.msk [vmem:[#allocation0] sm:$0x1] %vm27, %v26
    %s29 = scalar_lea.vmem %s0, 11
    %v30 = vld [vmem:[%s29] sm:$0x1]
    %31 = vrot.lane.b32.xlu0 %v30, 88
    %v32 = vpop.permute.xlu0 %31
    %vm33 = vcmask 786112
    %34 = vst.msk [vmem:[#allocation0] sm:$0x1] %vm33, %v32
    %s35 = scalar_lea.vmem %s0, 10
    %v36 = vld [vmem:[%s35] sm:$0x1]
    %37 = vrot.lane.b32.xlu0 %v36, 80
    %v38 = vpop.permute.xlu0 %37
    %vm39 = vcmask 720512
    %40 = vst.msk [vmem:[#allocation0] sm:$0x1] %vm39, %v38
    %s41 = scalar_lea.vmem %s0, 9
    %v42 = vld [vmem:[%s41] sm:$0x1]
    %43 = vrot.lane.b32.xlu0 %v42, 72
    %v44 = vpop.permute.xlu0 %43
    %vm45 = vcmask 654912
    %46 = vst.msk [vmem:[#allocation0] sm:$0x1] %vm45, %v44
    %s47 = scalar_lea.vmem %s0, 8
    %v48 = vld [vmem:[%s47] sm:$0x1]
    %49 = vrot.lane.b32.xlu0 %v48, 64
    %v50 = vpop.permute.xlu0 %49
    %vm51 = vcmask 589312
    %52 = vst.msk [vmem:[#allocation0] sm:$0x1] %vm51, %v50
    %s53 = scalar_lea.vmem %s0, 7
    %v54 = vld [vmem:[%s53] sm:$0x1]
    %55 = vrot.lane.b32.xlu0 %v54, 56
    %v56 = vpop.permute.xlu0 %55
    %vm57 = vcmask 523712
    %58 = vst.msk [vmem:[#allocation0] sm:$0x1] %vm57, %v56
    %s59 = scalar_lea.vmem %s0, 6
    %v60 = vld [vmem:[%s59] sm:$0x1]
    %61 = vrot.lane.b32.xlu0 %v60, 48
    %v62 = vpop.permute.xlu0 %61
    %vm63 = vcmask 458112
    %64 = vst.msk [vmem:[#allocation0] sm:$0x1] %vm63, %v62
    %s65 = scalar_lea.vmem %s0, 5
    %v66 = vld [vmem:[%s65] sm:$0x1]
    %67 = vrot.lane.b32.xlu0 %v66, 40
    %v68 = vpop.permute.xlu0 %67
    %vm69 = vcmask 392512
    %70 = vst.msk [vmem:[#allocation0] sm:$0x1] %vm69, %v68
    %s71 = scalar_lea.vmem %s0, 4
    %v72 = vld [vmem:[%s71] sm:$0x1]
    %73 = vrot.lane.b32.xlu0 %v72, 32
    %v74 = vpop.permute.xlu0 %73
    %vm75 = vcmask 326912
    %76 = vst.msk [vmem:[#allocation0] sm:$0x1] %vm75, %v74
    %s77 = scalar_lea.vmem %s0, 3
    %v78 = vld [vmem:[%s77] sm:$0x1]
    %79 = vrot.lane.b32.xlu0 %v78, 24
    %v80 = vpop.permute.xlu0 %79
    %vm81 = vcmask 261312
    %82 = vst.msk [vmem:[#allocation0] sm:$0x1] %vm81, %v80
    %s83 = scalar_lea.vmem %s0, 2
    %v84 = vld [vmem:[%s83] sm:$0x1]
    %85 = vrot.lane.b32.xlu0 %v84, 16
    %v86 = vpop.permute.xlu0 %85
    %vm87 = vcmask 195712
    %88 = vst.msk [vmem:[#allocation0] sm:$0x1] %vm87, %v86
    %s89 = scalar_lea.vmem %s0, 1
    %v90 = vld [vmem:[%s89] sm:$0x1]
    %91 = vrot.lane.b32.xlu0 %v90, 8
    %v92 = vpop.permute.xlu0 %91
    %vm93 = vcmask 130112
    %94 = vst.msk [vmem:[#allocation0] sm:$0x1] %vm93, %v92
    %s96 = sshllo.u32 0, 1
    %v98 = vld [vmem:[#allocation0] sm:%s96]
    %s99 = sshllo.u32 0, 1
    %100 = vst [vmem:[%s1] sm:%s99] %v98

// kernel: double_conv_nchw.1
$region0: #{double_conv_nchw.1}
  #allocation0 [shape = 'u32[]', space=smem, size = 0x4, offset = 0x4, fixed_abs, tag = 'smem constant byte address 0x4 - core index']
  #allocation1 [shape = 'u32[144,128]{1,0:T(1,128)}', space=vmem, size = 0x12000, scoped, tag = 'internal scratch']
  %s0 = inlined_call_operand.vmem [shape: f32[2,16,64], index: 0, kind: input, shape index: {}]
  %s1 = inlined_call_operand.vmem [shape: bf16[192,128], index: 1, kind: input, shape index: {}]
  %s2 = inlined_call_operand.vmem [shape: f32[1,128], index: 2, kind: input, shape index: {}]
  %s3 = inlined_call_operand.vmem [shape: bf16[384,128], index: 3, kind: input, shape index: {}]
  %s4 = inlined_call_operand.vmem [shape: f32[1,128], index: 4, kind: input, shape index: {}]
  %s5 = inlined_call_operand.vmem [shape: f32[2,16,128], index: 5, kind: output, shape index: {}]
  %s6 = sld [smem:[#allocation0]]
  $region53: #{double_conv_nchw.1} parent=0
    _
  %s8 = ssub.s32 1, %s6
  %s9 = scalar_select 0, %s8, %s6
  loop: start=0, step=1, limit=4
  $region2: #{double_conv_nchw.1} parent=0 // loop_pre_header
    _
  $region3: #{double_conv_nchw.1} parent=0 // loop_header
    %s11 = sphi 0, %s15
    %p12 = scmp.ge.s32.totalorder %s11, 4
    %s21 = sphi 0, %s23
    %s24 = sphi 0, %s21
    %s25 = sphi 0, %s24
    %s41 = sphi 0, %s25
    %s45 = sphi 0, %s45
    %s47 = sphi 0, %s45
    %s48 = sphi 0, %s47
    %s62 = sphi 0, %s48
    %s66 = sphi 0, %s66
    %s68 = sphi 0, %s66
    %s69 = sphi 0, %s68
    %s83 = sphi 0, %s69
    %s87 = sphi 0, %s87
    %s89 = sphi 0, %s87
    %s90 = sphi 0, %s89
    %s104 = sphi 0, %s90
    %s108 = sphi 0, %s108
    %s110 = sphi 0, %s108
    %s111 = sphi 0, %s110
    %s125 = sphi 0, %s111
    %s131 = sphi 0, %s133
    %s134 = sphi 0, %s131
    %s135 = sphi 0, %s134
    %s151 = sphi 0, %s135
  $region4: #{double_conv_nchw.1} parent=0 // loop_header_branch
    %14 = sbr.rel (%p12) target = $region8
  $region5: #{double_conv_nchw.1} parent=0 // loop_body
    %s16 = ssub.s32 %s11, 1
    %s17 = ssub.s32 %s11, 2
    %s18 = sadd.s32 %s11, 1
    %s19 = ssub.s32 %s11, %s18
    %p20 = scmp.eq.s32.totalorder %s19, 0
    %s22 = sadd.s32 %s21, 1
    %s23 = scalar_select %p20, %s21, %s22
    %p26 = pneg %p20
    %p27 = scmp.eq.s32.totalorder %s11, 1
    %p28 = por %p26, %p27
    %p29 = scmp.ne.s32.totalorder %s21, %s24
    %p30 = scmp.eq.s32.totalorder %s11, 0
    %p31 = por %p29, %p30
    %p32 = scmp.ne.s32.totalorder %s21, %s24
    %p33 = scmp.eq.s32.totalorder %s16, 1
    %p34 = por %p32, %p33
    %p35 = scmp.ne.s32.totalorder %s24, %s25
    %p36 = scmp.eq.s32.totalorder %s16, 0
    %p37 = por %p35, %p36
    %p38 = scmp.ne.s32.totalorder %s24, %s25
    %p39 = scmp.eq.s32.totalorder %s17, 1
    %p40 = por %p38, %p39
    %p42 = scmp.ne.s32.totalorder %s25, %s41
    %p43 = scmp.eq.s32.totalorder %s17, 0
    %p44 = por %p42, %p43
    %s46 = sadd.s32 %s45, 1
    %p49 = scmp.eq.s32.totalorder %s11, 1
    %p50 = scmp.ne.s32.totalorder %s45, %s47
    %p51 = scmp.eq.s32.totalorder %s11, 0
    %p52 = por %p50, %p51
    %p53 = scmp.ne.s32.totalorder %s45, %s47
    %p54 = scmp.eq.s32.totalorder %s16, 1
    %p55 = por %p53, %p54
    %p56 = scmp.ne.s32.totalorder %s47, %s48
    %p57 = scmp.eq.s32.totalorder %s16, 0
    %p58 = por %p56, %p57
    %p59 = scmp.ne.s32.totalorder %s47, %s48
    %p60 = scmp.eq.s32.totalorder %s17, 1
    %p61 = por %p59, %p60
    %p63 = scmp.ne.s32.totalorder %s48, %s62
    %p64 = scmp.eq.s32.totalorder %s17, 0
    %p65 = por %p63, %p64
    %s67 = sadd.s32 %s66, 1
    %p70 = scmp.eq.s32.totalorder %s11, 1
    %p71 = scmp.ne.s32.totalorder %s66, %s68
    %p72 = scmp.eq.s32.totalorder %s11, 0
    %p73 = por %p71, %p72
    %p74 = scmp.ne.s32.totalorder %s66, %s68
    %p75 = scmp.eq.s32.totalorder %s16, 1
    %p76 = por %p74, %p75
    %p77 = scmp.ne.s32.totalorder %s68, %s69
    %p78 = scmp.eq.s32.totalorder %s16, 0
    %p79 = por %p77, %p78
    %p80 = scmp.ne.s32.totalorder %s68, %s69
    %p81 = scmp.eq.s32.totalorder %s17, 1
    %p82 = por %p80, %p81
    %p84 = scmp.ne.s32.totalorder %s69, %s83
    %p85 = scmp.eq.s32.totalorder %s17, 0
    %p86 = por %p84, %p85
    %s88 = sadd.s32 %s87, 1
    %p91 = scmp.eq.s32.totalorder %s11, 1
    %p92 = scmp.ne.s32.totalorder %s87, %s89
    %p93 = scmp.eq.s32.totalorder %s11, 0
    %p94 = por %p92, %p93
    %p95 = scmp.ne.s32.totalorder %s87, %s89
    %p96 = scmp.eq.s32.totalorder %s16, 1
    %p97 = por %p95, %p96
    %p98 = scmp.ne.s32.totalorder %s89, %s90
    %p99 = scmp.eq.s32.totalorder %s16, 0
    %p100 = por %p98, %p99
    %p101 = scmp.ne.s32.totalorder %s89, %s90
    %p102 = scmp.eq.s32.totalorder %s17, 1
    %p103 = por %p101, %p102
    %p105 = scmp.ne.s32.totalorder %s90, %s104
    %p106 = scmp.eq.s32.totalorder %s17, 0
    %p107 = por %p105, %p106
    %s109 = sadd.s32 %s108, 1
    %p112 = scmp.eq.s32.totalorder %s11, 1
    %p113 = scmp.ne.s32.totalorder %s108, %s110
    %p114 = scmp.eq.s32.totalorder %s11, 0
    %p115 = por %p113, %p114
    %p116 = scmp.ne.s32.totalorder %s108, %s110
    %p117 = scmp.eq.s32.totalorder %s16, 1
    %p118 = por %p116, %p117
    %p119 = scmp.ne.s32.totalorder %s110, %s111
    %p120 = scmp.eq.s32.totalorder %s16, 0
    %p121 = por %p119, %p120
    %p122 = scmp.ne.s32.totalorder %s110, %s111
    %p123 = scmp.eq.s32.totalorder %s17, 1
    %p124 = por %p122, %p123
    %p126 = scmp.ne.s32.totalorder %s111, %s125
    %p127 = scmp.eq.s32.totalorder %s17, 0
    %p128 = por %p126, %p127
    %s129 = ssub.s32 %s11, %s18
    %p130 = scmp.eq.s32.totalorder %s129, 0
    %s132 = sadd.s32 %s131, 1
    %s133 = scalar_select %p130, %s131, %s132
    %p136 = pneg %p130
    %p137 = scmp.eq.s32.totalorder %s11, 1
    %p138 = por %p136, %p137
    %p139 = scmp.ne.s32.totalorder %s131, %s134
    %p140 = scmp.eq.s32.totalorder %s11, 0
    %p141 = por %p139, %p140
    %p142 = scmp.ne.s32.totalorder %s131, %s134
    %p143 = scmp.eq.s32.totalorder %s16, 1
    %p144 = por %p142, %p143
    %p145 = scmp.ne.s32.totalorder %s134, %s135
    %p146 = scmp.eq.s32.totalorder %s16, 0
    %p147 = por %p145, %p146
    %p148 = scmp.ne.s32.totalorder %s134, %s135
    %p149 = scmp.eq.s32.totalorder %s17, 1
    %p150 = por %p148, %p149
    %p152 = scmp.ne.s32.totalorder %s135, %s151
    %p153 = scmp.eq.s32.totalorder %s17, 0
    %p154 = por %p152, %p153
    %p155 = scmp.le.s32.totalorder 1, %s11
    %p156 = scmp.lt.s32.totalorder %s11, 3
    %p157 = pnand %p155, %p156
    %p158 = pneg %p157
    // Predicated region
    $region9: #{double_conv_nchw.1} parent=5 // pred_check
      _
    $region10: #{double_conv_nchw.1} parent=5 // pred_check_branch
      %160 = sbr.rel (%p157) target = $region12
    $region11: #{double_conv_nchw.1} parent=5 // pred_region
      %s161 = ssub.s32 %s11, 1
      // Predicated region
      $region13: #{double_conv_nchw.1} parent=11 // pred_check
        %p162 = pneg %p58
      $region14: #{double_conv_nchw.1} parent=11 // pred_check_branch
        %164 = sbr.rel (%p162) target = $region16
      $region15: #{double_conv_nchw.1} parent=11 // pred_region
        _
      $region16: #{double_conv_nchw.1} parent=11 // pred_fallthru
        _
      // Predicated region
      $region17: #{double_conv_nchw.1} parent=11 // pred_check
        %p165 = pneg %p79
      $region18: #{double_conv_nchw.1} parent=11 // pred_check_branch
        %167 = sbr.rel (%p165) target = $region20
      $region19: #{double_conv_nchw.1} parent=11 // pred_region
        _
      $region20: #{double_conv_nchw.1} parent=11 // pred_fallthru
        _
      // Predicated region
      $region21: #{double_conv_nchw.1} parent=11 // pred_check
        %p168 = pneg %p100
      $region22: #{double_conv_nchw.1} parent=11 // pred_check_branch
        %170 = sbr.rel (%p168) target = $region24
      $region23: #{double_conv_nchw.1} parent=11 // pred_region
        _
      $region24: #{double_conv_nchw.1} parent=11 // pred_fallthru
        _
      // Predicated region
      $region25: #{double_conv_nchw.1} parent=11 // pred_check
        %p171 = pneg %p121
      $region26: #{double_conv_nchw.1} parent=11 // pred_check_branch
        %173 = sbr.rel (%p171) target = $region28
      $region27: #{double_conv_nchw.1} parent=11 // pred_region
        _
      $region28: #{double_conv_nchw.1} parent=11 // pred_fallthru
        _
    $region12: #{double_conv_nchw.1} parent=5 // pred_fallthru
      _
    %p174 = scmp.lt.s32.totalorder %s11, 2
    // Predicated region
    $region29: #{double_conv_nchw.1} parent=5 // pred_check
      %p175 = pneg %p174
    $region30: #{double_conv_nchw.1} parent=5 // pred_check_branch
      %177 = sbr.rel (%p175) target = $region32
    $region31: #{double_conv_nchw.1} parent=5 // pred_region
      // Predicated region
      $region33: #{double_conv_nchw.1} parent=31 // pred_check
        %p178 = pneg %p31
      $region34: #{double_conv_nchw.1} parent=31 // pred_check_branch
        %180 = sbr.rel (%p178) target = $region36
      $region35: #{double_conv_nchw.1} parent=31 // pred_region
        %p181 = scmp.lt.s32.totalorder %s11, 1
        %s182 = scalar_select %p181, %s11, 1
        %s183 = smul.addr %s182, 2
        %s184 = smul.addr %s183, 8
        %s185 = scalar_lea.vmem %s0, %s184
      $region36: #{double_conv_nchw.1} parent=31 // pred_fallthru
        _
    $region32: #{double_conv_nchw.1} parent=5 // pred_fallthru
      _
    %p186 = scmp.le.s32.totalorder 1, %s11
    %p187 = scmp.lt.s32.totalorder %s11, 3
    %p188 = pnand %p186, %p187
    %p189 = pneg %p188
    // Predicated region
    $region37: #{double_conv_nchw.1} parent=5 // pred_check
      _
    $region38: #{double_conv_nchw.1} parent=5 // pred_check_branch
      %191 = sbr.rel (%p188) target = $region40
    $region39: #{double_conv_nchw.1} parent=5 // pred_region
      %s192 = ssub.s32 %s11, 1
      %p193 = scmp.lt.s32.totalorder %s16, 1
      %s194 = scalar_select %p193, %s16, 1
      %s195 = smul.addr %s194, 2
      %s196 = smul.addr %s195, 8
      %s197 = scalar_lea.vmem %s0, %s196
      %p198 = pneg %p37
      %p199 = pneg %p34
      %p200 = pneg %p58
      %p201 = pneg %p55
      %p202 = pneg %p79
      %p203 = pneg %p76
      %p204 = pneg %p100
      %p205 = pneg %p97
      %p206 = pneg %p121
      %p207 = pneg %p118
      %p208 = pneg %p147
      %p209 = pneg %p144
      %p210 = scmp.lt.s32.totalorder %s16, 1
      %s211 = scalar_select %p210, %s16, 1
      %s212 = smul.addr %s211, 2
      %s213 = smul.addr %s212, 8
      %s214 = scalar_lea.vmem %s5, %s213
      %p215 = scmp.lt.s32.totalorder %s16, 1
      %s216 = scalar_select %p215, %s16, 1
      %s217 = smul.addr %s216, 2
      %s218 = smul.addr %s217, 8
      %s219 = scalar_lea.vmem %s0, %s218
      %p220 = scmp.lt.s32.totalorder %s16, 1
      %s221 = scalar_select %p220, %s16, 1
      %s222 = smul.addr %s221, 2
      %s223 = smul.addr %s222, 8
      %s224 = scalar_lea.vmem %s5, %s223
      %v226 = vld [vmem:[%s219] sm:$0xff]
      %v227 = vld [vmem:[%s219 + $0x8] sm:$0xff]
      %v228 = vlaneseq
      %v229 = vshrl.u32 %v228, 7
      %v230 = vadd.s32 %v229, 8
      %vm231 = vcmp.lt.s32.totalorder %v229, 0
      %v232 = vsub.s32 0, %v229
      %v233 = vsel %vm231, %v232, %v229
      %v234 = vshrl.u32 %v233, 4
      %v235 = vand.u32 %v233, 15
      %v236 = vsub.s32 0, %v235
      %v237 = vsel %vm231, %v236, %v235
      %vm238 = vcmp.lt.s32.totalorder %v230, 0
      %v239 = vsub.s32 0, %v230
      %v240 = vsel %vm238, %v239, %v230
      %v241 = vshrl.u32 %v240, 4
      %v242 = vand.u32 %v240, 15
      %v243 = vsub.s32 0, %v242
      %v244 = vsel %vm238, %v243, %v242
      %vm245 = vcmp.ne.s32.totalorder %v237, 0
      %vm246 = vcmp.ne.s32.totalorder %v244, 0
      %vm247 = vcmp.lt.s32.totalorder %v237, 0
      %vm248 = vcmp.lt.s32.totalorder %v244, 0
      %vm249 = vmand %vm247, %vm245
      %vm250 = vmand %vm248, %vm246
      %v251 = vadd.s32 %v237, 16
      %v252 = vadd.s32 %v244, 16
      %v253 = vsel %vm249, %v251, %v237
      %v254 = vsel %vm250, %v252, %v244
      %vm255 = vcmp.eq.s32.totalorder %v253, 0
      %vm256 = vcmp.eq.s32.totalorder %v254, 0
      %vm257 = vcmp.eq.s32.totalorder %v253, 15
      %vm258 = vcmp.eq.s32.totalorder %v254, 15
      %v259 = vrot.slane %v226, 7
      %v260 = vrot.slane %v227, 7
      %vm261 = vcmp.lt.s32.totalorder %v229, 1
      %v262 = vsel %vm261, %v259, %v260
      %v263 = vsel %vm261, %v260, %v259
      %v264 = vsel %vm255, 1, 0
      %v265 = vsel %vm256, 1, 0
      %vm266 = vcmp.eq.s32.totalorder %v264, 1
      %vm267 = vcmp.eq.s32.totalorder %v265, 1
      %v268 = vsel %vm266, 0.0, %v263
      %v269 = vsel %vm267, 0.0, %v262
      %v270 = vrot.slane %v226, 1
      %v271 = vrot.slane %v227, 1
      %vm272 = vcmp.lt.s32.totalorder %v229, 7
      %v273 = vsel %vm272, %v270, %v271
      %v274 = vsel %vm272, %v271, %v270
      %v275 = vsel %vm257, 1, 0
      %v276 = vsel %vm258, 1, 0
      %vm277 = vcmp.eq.s32.totalorder %v275, 1
      %vm278 = vcmp.eq.s32.totalorder %v276, 1
      %v279 = vsel %vm277, 0.0, %v273
      %v280 = vsel %vm278, 0.0, %v274
      %v281 = vpack.c.bf16 %v269, %v268
      %v282 = vpack.c.bf16 %v227, %v226
      %v283 = vpack.c.bf16 %v280, %v279
      %285 = vrot.lane.b32.xlu0 %v282, 64
      %v286 = vpop.permute.xlu0 %285
      %vm287 = vcmask 523264
      %v290 = vsel %vm287, %v281, %v286
      %v292 = vld [vmem:[%s1] sm:$0xf]
      %v293 = vld [vmem:[%s1 + $0x4] sm:$0xf]
      %v294 = vld [vmem:[%s1 + $0x8] sm:$0xf]
      %v295 = vld [vmem:[%s1 + $0xc] sm:$0xf]
      %v296 = vld [vmem:[%s1 + $0x10] sm:$0xf]
      %v297 = vld [vmem:[%s1 + $0x14] sm:$0xf]
      %v298 = vld [vmem:[%s1 + $0x18] sm:$0xf]
      %v299 = vld [vmem:[%s1 + $0x1c] sm:$0xf]
      %v300 = vld [vmem:[%s1 + $0x20] sm:$0xf]
      %v301 = vld [vmem:[%s1 + $0x24] sm:$0xf]
      %v302 = vld [vmem:[%s1 + $0x28] sm:$0xf]
      %v303 = vld [vmem:[%s1 + $0x2c] sm:$0xf]
      %v304 = vld [vmem:[%s1 + $0x30] sm:$0xf]
      %v305 = vld [vmem:[%s1 + $0x34] sm:$0xf]
      %v306 = vld [vmem:[%s1 + $0x38] sm:$0xf]
      %v307 = vld [vmem:[%s1 + $0x3c] sm:$0xf]
      %v308 = vld [vmem:[%s1 + $0x40] sm:$0xf]
      %v309 = vld [vmem:[%s1 + $0x44] sm:$0xf]
      %v310 = vld [vmem:[%s1 + $0x48] sm:$0xf]
      %v311 = vld [vmem:[%s1 + $0x4c] sm:$0xf]
      %v312 = vld [vmem:[%s1 + $0x50] sm:$0xf]
      %v313 = vld [vmem:[%s1 + $0x54] sm:$0xf]
      %v314 = vld [vmem:[%s1 + $0x58] sm:$0xf]
      %v315 = vld [vmem:[%s1 + $0x5c] sm:$0xf]
      %v316 = vld [vmem:[%s2] sm:$0x1]
      %v318 = vlaneseq
      %v319 = vshrl.u32 %v318, 7
      %v320 = vsub.s32 0, %v319
      %v321 = vrot.slane %v316, %v320
      %v347 = vunpack.c.l.b16 %v292
      %v348 = vunpack.c.l.b16 %v293
      %v349 = vunpack.c.l.b16 %v294
      %v350 = vunpack.c.l.b16 %v295
      %v351 = vunpack.c.l.b16 %v296
      %v352 = vunpack.c.l.b16 %v297
      %v353 = vunpack.c.l.b16 %v298
      %v354 = vunpack.c.l.b16 %v299
      %v355 = vunpack.c.l.b16 %v300
      %v356 = vunpack.c.l.b16 %v301
      %v357 = vunpack.c.l.b16 %v302
      %v358 = vunpack.c.l.b16 %v303
      %v359 = vunpack.c.l.b16 %v304
      %v360 = vunpack.c.l.b16 %v305
      %v361 = vunpack.c.l.b16 %v306
      %v362 = vunpack.c.l.b16 %v307
      %v363 = vunpack.c.l.b16 %v308
      %v364 = vunpack.c.l.b16 %v309
      %v365 = vunpack.c.l.b16 %v310
      %v366 = vunpack.c.l.b16 %v311
      %v367 = vunpack.c.l.b16 %v312
      %v368 = vunpack.c.l.b16 %v313
      %v369 = vunpack.c.l.b16 %v314
      %v370 = vunpack.c.l.b16 %v315
      %v371 = vpack.c.b16 %v348, %v347
      %v372 = vpack.c.b16 %v350, %v349
      %v373 = vpack.c.b16 %v352, %v351
      %v374 = vpack.c.b16 %v354, %v353
      %v375 = vpack.c.b16 %v356, %v355
      %v376 = vpack.c.b16 %v358, %v357
      %v377 = vpack.c.b16 %v360, %v359
      %v378 = vpack.c.b16 %v362, %v361
      %v379 = vpack.c.b16 %v364, %v363
      %v380 = vpack.c.b16 %v366, %v365
      %v381 = vpack.c.b16 %v368, %v367
      %v382 = vpack.c.b16 %v370, %v369
      %v396 = vsel %vm287, %v283, 0
      %398 = vmatprep.subr.bf16.mxu0 0
      %399 = vmatpush1.bf16.msra.mxu0 %v371
      %400 = vmatprep.subr.bf16.mxu0 0
      %401 = vmatpush1.bf16.msra.mxu0 %v372
      %402 = vmatprep.subr.bf16.mxu0 0
      %403 = vmatpush1.bf16.msra.mxu0 %v373
      %404 = vmatprep.subr.bf16.mxu0 0
      %405 = vmatpush1.bf16.msra.mxu0 %v374
      %406 = vmatprep.subr.bf16.mxu0 0
      %407 = vmatpush1.bf16.msra.mxu0 %v375
      %408 = vmatprep.subr.bf16.mxu0 0
      %409 = vmatpush1.bf16.msra.mxu0 %v376
      %410 = vmatprep.subr.bf16.mxu0 0
      %411 = vmatpush1.bf16.msra.mxu0 %v377
      %412 = vmatprep.subr.bf16.mxu0 0
      %413 = vmatpush1.bf16.msra.mxu0 %v378
      %414 = vmatprep.subr.bf16.mxu0 0
      %415 = vmatpush1.bf16.msra.mxu0 %v379
      %416 = vmatprep.subr.bf16.mxu0 0
      %417 = vmatpush1.bf16.msra.mxu0 %v380
      %418 = vmatprep.subr.bf16.mxu0 0
      %419 = vmatpush1.bf16.msra.mxu0 %v381
      %420 = vmatprep.subr.bf16.mxu0 0
      %421 = vmatpush1.bf16.msra.mxu0 %v382
      %422 = vmatprep.subr.bf16.mxu0 0
      %423 = vmatpush1.bf16.msra.mxu0 0
      %424 = vmatprep.subr.bf16.mxu0 0
      %425 = vmatpush1.bf16.msra.mxu0 0
      %426 = vmatprep.subr.bf16.mxu0 0
      %427 = vmatpush1.bf16.msra.mxu0 0
      %428 = vmatprep.subr.bf16.mxu0 0
      %429 = vmatpush1.bf16.msra.mxu0 0
      %430 = vmatprep.mubr.bf16.mxu0 %v396
      %431 = vmatmul.mubr.bf16.gmra.mrb[0].mxu0 %v290
      %v432 = vpop.f32.mrb[0].mxu0
      %v433 = vadd.f32 %v321, %v432
      %v434 = vpop.f32.mrb[0].mxu0
      %v435 = vpop.f32.mrb[0].mxu0
      %v436 = vadd.f32 %v321, %v435
      %v437 = vpop.f32.mrb[0].mxu0
      %438 = vdwg.mxu0
      %v439 = vmax.f32 %v433, 0.0
      %v440 = vmax.f32 %v436, 0.0
      %v441 = vrot.slane %v439, 7
      %v442 = vrot.slane %v440, 7
      %v443 = vsel %vm261, %v441, %v442
      %v444 = vsel %vm261, %v442, %v441
      %v445 = vsel %vm266, 0.0, %v444
      %v446 = vsel %vm267, 0.0, %v443
      %v447 = vrot.slane %v439, 1
      %v448 = vrot.slane %v440, 1
      %v449 = vsel %vm272, %v447, %v448
      %v450 = vsel %vm272, %v448, %v447
      %v451 = vsel %vm277, 0.0, %v449
      %v452 = vsel %vm278, 0.0, %v450
      %v453 = vpack.c.bf16 %v446, %v445
      %v454 = vpack.c.bf16 %v440, %v439
      %v455 = vpack.c.bf16 %v452, %v451
      %v456 = vld [vmem:[%s3] sm:$0xf]
      %v457 = vld [vmem:[%s3 + $0x4] sm:$0xf]
      %v458 = vld [vmem:[%s3 + $0x8] sm:$0xf]
      %v459 = vld [vmem:[%s3 + $0xc] sm:$0xf]
      %v460 = vld [vmem:[%s3 + $0x10] sm:$0xf]
      %v461 = vld [vmem:[%s3 + $0x14] sm:$0xf]
      %v462 = vld [vmem:[%s3 + $0x18] sm:$0xf]
      %v463 = vld [vmem:[%s3 + $0x1c] sm:$0xf]
      %v464 = vld [vmem:[%s3 + $0x20] sm:$0xf]
      %v465 = vld [vmem:[%s3 + $0x24] sm:$0xf]
      %v466 = vld [vmem:[%s3 + $0x28] sm:$0xf]
      %v467 = vld [vmem:[%s3 + $0x2c] sm:$0xf]
      %v468 = vld [vmem:[%s3 + $0x30] sm:$0xf]
      %v469 = vld [vmem:[%s3 + $0x34] sm:$0xf]
      %v470 = vld [vmem:[%s3 + $0x38] sm:$0xf]
      %v471 = vld [vmem:[%s3 + $0x3c] sm:$0xf]
      %v472 = vld [vmem:[%s3 + $0x40] sm:$0xf]
      %v473 = vld [vmem:[%s3 + $0x44] sm:$0xf]
      %v474 = vld [vmem:[%s3 + $0x48] sm:$0xf]
      %v475 = vld [vmem:[%s3 + $0x4c] sm:$0xf]
      %v476 = vld [vmem:[%s3 + $0x50] sm:$0xf]
      %v477 = vld [vmem:[%s3 + $0x54] sm:$0xf]
      %v478 = vld [vmem:[%s3 + $0x58] sm:$0xf]
      %v479 = vld [vmem:[%s3 + $0x5c] sm:$0xf]
      %v480 = vld [vmem:[%s3 + $0x60] sm:$0xf]
      %v481 = vld [vmem:[%s3 + $0x64] sm:$0xf]
      %v482 = vld [vmem:[%s3 + $0x68] sm:$0xf]
      %v483 = vld [vmem:[%s3 + $0x6c] sm:$0xf]
      %v484 = vld [vmem:[%s3 + $0x70] sm:$0xf]
      %v485 = vld [vmem:[%s3 + $0x74] sm:$0xf]
      %v486 = vld [vmem:[%s3 + $0x78] sm:$0xf]
      %v487 = vld [vmem:[%s3 + $0x7c] sm:$0xf]
      %v488 = vld [vmem:[%s3 + $0x80] sm:$0xf]
      %v489 = vld [vmem:[%s3 + $0x84] sm:$0xf]
      %v490 = vld [vmem:[%s3 + $0x88] sm:$0xf]
      %v491 = vld [vmem:[%s3 + $0x8c] sm:$0xf]
      %v492 = vld [vmem:[%s3 + $0x90] sm:$0xf]
      %v493 = vld [vmem:[%s3 + $0x94] sm:$0xf]
      %v494 = vld [vmem:[%s3 + $0x98] sm:$0xf]
      %v495 = vld [vmem:[%s3 + $0x9c] sm:$0xf]
      %v496 = vld [vmem:[%s3 + $0xa0] sm:$0xf]
      %v497 = vld [vmem:[%s3 + $0xa4] sm:$0xf]
      %v498 = vld [vmem:[%s3 + $0xa8] sm:$0xf]
      %v499 = vld [vmem:[%s3 + $0xac] sm:$0xf]
      %v500 = vld [vmem:[%s3 + $0xb0] sm:$0xf]
      %v501 = vld [vmem:[%s3 + $0xb4] sm:$0xf]
      %v502 = vld [vmem:[%s3 + $0xb8] sm:$0xf]
      %v503 = vld [vmem:[%s3 + $0xbc] sm:$0xf]
      %v504 = vld [vmem:[%s4] sm:$0x1]
      %v506 = vlaneseq
      %v507 = vshrl.u32 %v506, 7
      %v508 = vsub.s32 0, %v507
      %v509 = vrot.slane %v504, %v508
      %v559 = vunpack.c.l.b16 %v456
      %v560 = vunpack.c.l.b16 %v457
      %v561 = vunpack.c.l.b16 %v458
      %v562 = vunpack.c.l.b16 %v459
      %v563 = vunpack.c.l.b16 %v460
      %v564 = vunpack.c.l.b16 %v461
      %v565 = vunpack.c.l.b16 %v462
      %v566 = vunpack.c.l.b16 %v463
      %v567 = vunpack.c.l.b16 %v464
      %v568 = vunpack.c.l.b16 %v465
      %v569 = vunpack.c.l.b16 %v466
      %v570 = vunpack.c.l.b16 %v467
      %v571 = vunpack.c.l.b16 %v468
      %v572 = vunpack.c.l.b16 %v469
      %v573 = vunpack.c.l.b16 %v470
      %v574 = vunpack.c.l.b16 %v471
      %v575 = vunpack.c.l.b16 %v472
      %v576 = vunpack.c.l.b16 %v473
      %v577 = vunpack.c.l.b16 %v474
      %v578 = vunpack.c.l.b16 %v475
      %v579 = vunpack.c.l.b16 %v476
      %v580 = vunpack.c.l.b16 %v477
      %v581 = vunpack.c.l.b16 %v478
      %v582 = vunpack.c.l.b16 %v479
      %v583 = vunpack.c.l.b16 %v480
      %v584 = vunpack.c.l.b16 %v481
      %v585 = vunpack.c.l.b16 %v482
      %v586 = vunpack.c.l.b16 %v483
      %v587 = vunpack.c.l.b16 %v484
      %v588 = vunpack.c.l.b16 %v485
      %v589 = vunpack.c.l.b16 %v486
      %v590 = vunpack.c.l.b16 %v487
      %v591 = vunpack.c.l.b16 %v488
      %v592 = vunpack.c.l.b16 %v489
      %v593 = vunpack.c.l.b16 %v490
      %v594 = vunpack.c.l.b16 %v491
      %v595 = vunpack.c.l.b16 %v492
      %v596 = vunpack.c.l.b16 %v493
      %v597 = vunpack.c.l.b16 %v494
      %v598 = vunpack.c.l.b16 %v495
      %v599 = vunpack.c.l.b16 %v496
      %v600 = vunpack.c.l.b16 %v497
      %v601 = vunpack.c.l.b16 %v498
      %v602 = vunpack.c.l.b16 %v499
      %v603 = vunpack.c.l.b16 %v500
      %v604 = vunpack.c.l.b16 %v501
      %v605 = vunpack.c.l.b16 %v502
      %v606 = vunpack.c.l.b16 %v503
      %v607 = vpack.c.b16 %v560, %v559
      %v608 = vpack.c.b16 %v562, %v561
      %v609 = vpack.c.b16 %v564, %v563
      %v610 = vpack.c.b16 %v566, %v565
      %v611 = vpack.c.b16 %v568, %v567
      %v612 = vpack.c.b16 %v570, %v569
      %v613 = vpack.c.b16 %v572, %v571
      %v614 = vpack.c.b16 %v574, %v573
      %v615 = vpack.c.b16 %v576, %v575
      %v616 = vpack.c.b16 %v578, %v577
      %v617 = vpack.c.b16 %v580, %v579
      %v618 = vpack.c.b16 %v582, %v581
      %v619 = vpack.c.b16 %v584, %v583
      %v620 = vpack.c.b16 %v586, %v585
      %v621 = vpack.c.b16 %v588, %v587
      %v622 = vpack.c.b16 %v590, %v589
      %v623 = vpack.c.b16 %v592, %v591
      %v624 = vpack.c.b16 %v594, %v593
      %v625 = vpack.c.b16 %v596, %v595
      %v626 = vpack.c.b16 %v598, %v597
      %v627 = vpack.c.b16 %v600, %v599
      %v628 = vpack.c.b16 %v602, %v601
      %v629 = vpack.c.b16 %v604, %v603
      %v630 = vpack.c.b16 %v606, %v605
      %655 = vmatprep.subr.bf16.mxu0 0
      %656 = vmatpush1.bf16.msra.mxu0 %v607
      %657 = vmatprep.subr.bf16.mxu0 0
      %658 = vmatpush1.bf16.msra.mxu0 %v608
      %659 = vmatprep.subr.bf16.mxu0 0
      %660 = vmatpush1.bf16.msra.mxu0 %v609
      %661 = vmatprep.subr.bf16.mxu0 0
      %662 = vmatpush1.bf16.msra.mxu0 %v610
      %663 = vmatprep.subr.bf16.mxu0 0
      %664 = vmatpush1.bf16.msra.mxu0 %v611
      %665 = vmatprep.subr.bf16.mxu0 0
      %666 = vmatpush1.bf16.msra.mxu0 %v612
      %667 = vmatprep.subr.bf16.mxu0 0
      %668 = vmatpush1.bf16.msra.mxu0 %v613
      %669 = vmatprep.subr.bf16.mxu0 0
      %670 = vmatpush1.bf16.msra.mxu0 %v614
      %671 = vmatprep.subr.bf16.mxu0 0
      %672 = vmatpush1.bf16.msra.mxu0 %v615
      %673 = vmatprep.subr.bf16.mxu0 0
      %674 = vmatpush1.bf16.msra.mxu0 %v616
      %675 = vmatprep.subr.bf16.mxu0 0
      %676 = vmatpush1.bf16.msra.mxu0 %v617
      %677 = vmatprep.subr.bf16.mxu0 0
      %678 = vmatpush1.bf16.msra.mxu0 %v618
      %679 = vmatprep.subr.bf16.mxu0 0
      %680 = vmatpush1.bf16.msra.mxu0 %v619
      %681 = vmatprep.subr.bf16.mxu0 0
      %682 = vmatpush1.bf16.msra.mxu0 %v620
      %683 = vmatprep.subr.bf16.mxu0 0
      %684 = vmatpush1.bf16.msra.mxu0 %v621
      %685 = vmatprep.subr.bf16.mxu0 0
      %686 = vmatpush1.bf16.msra.mxu0 %v622
      %687 = vmatprep.mubr.bf16.mxu0 %v454
      %688 = vmatmul.mubr.bf16.gmra.mrb[0].mxu0 %v453
      %v689 = vpop.f32.mrb[0].mxu0
      %v690 = vadd.f32 %v509, %v689
      %v691 = vpop.f32.mrb[0].mxu0
      %v692 = vpop.f32.mrb[0].mxu0
      %v693 = vadd.f32 %v509, %v692
      %v694 = vpop.f32.mrb[0].mxu0
      %695 = vdwg.mxu0
      %696 = vmatprep.subr.bf16.mxu0 0
      %697 = vmatpush1.bf16.msra.mxu0 %v623
      %698 = vmatprep.subr.bf16.mxu0 0
      %699 = vmatpush1.bf16.msra.mxu0 %v624
      %700 = vmatprep.subr.bf16.mxu0 0
      %701 = vmatpush1.bf16.msra.mxu0 %v625
      %702 = vmatprep.subr.bf16.mxu0 0
      %703 = vmatpush1.bf16.msra.mxu0 %v626
      %704 = vmatprep.subr.bf16.mxu0 0
      %705 = vmatpush1.bf16.msra.mxu0 %v627
      %706 = vmatprep.subr.bf16.mxu0 0
      %707 = vmatpush1.bf16.msra.mxu0 %v628
      %708 = vmatprep.subr.bf16.mxu0 0
      %709 = vmatpush1.bf16.msra.mxu0 %v629
      %710 = vmatprep.subr.bf16.mxu0 0
      %711 = vmatpush1.bf16.msra.mxu0 %v630
      %712 = vmatprep.subr.bf16.mxu0 0
      %713 = vmatpush1.bf16.msra.mxu0 0
      %714 = vmatprep.subr.bf16.mxu0 0
      %715 = vmatpush1.bf16.msra.mxu0 0
      %716 = vmatprep.subr.bf16.mxu0 0
      %717 = vmatpush1.bf16.msra.mxu0 0
      %718 = vmatprep.subr.bf16.mxu0 0
      %719 = vmatpush1.bf16.msra.mxu0 0
      %720 = vmatprep.subr.bf16.mxu0 0
      %721 = vmatpush1.bf16.msra.mxu0 0
      %722 = vmatprep.subr.bf16.mxu0 0
      %723 = vmatpush1.bf16.msra.mxu0 0
      %724 = vmatprep.subr.bf16.mxu0 0
      %725 = vmatpush1.bf16.msra.mxu0 0
      %726 = vmatprep.subr.bf16.mxu0 0
      %727 = vmatpush1.bf16.msra.mxu0 0
      %728 = vmatprep.mubr.bf16.mxu0 0
      %729 = vmatmul.mubr.bf16.gmra.mrb[0].mxu0 %v455
      %v730 = vpop.f32.mrb[0].mxu0
      %v731 = vadd.f32 %v690, %v730
      %v732 = vpop.f32.mrb[0].mxu0
      %v733 = vpop.f32.mrb[0].mxu0
      %v734 = vadd.f32 %v693, %v733
      %v735 = vpop.f32.mrb[0].mxu0
      %736 = vdwg.mxu0
      %v737 = vmax.f32 %v731, 0.0
      %v738 = vmax.f32 %v734, 0.0
      %739 = vst [vmem:[%s224] sm:$0xff] %v737
      %740 = vst [vmem:[%s224 + $0x8] sm:$0xff] %v738
      %p741 = scmp.lt.s32.totalorder %s16, 1
      %s742 = scalar_select %p741, %s16, 1
      %s743 = smul.addr %s742, 2
      %s744 = smul.addr %s743, 8
      %s745 = scalar_lea.vmem %s5, %s744
      // Predicated region
      $region41: #{double_conv_nchw.1} parent=39 // pred_check
        %p746 = pneg %p144
      $region42: #{double_conv_nchw.1} parent=39 // pred_check_branch
        %748 = sbr.rel (%p746) target = $region44
      $region43: #{double_conv_nchw.1} parent=39 // pred_region
        _
      $region44: #{double_conv_nchw.1} parent=39 // pred_fallthru
        _
    $region40: #{double_conv_nchw.1} parent=5 // pred_fallthru
      _
    %p749 = scmp.le.s32.totalorder 2, %s11
    // Predicated region
    $region45: #{double_conv_nchw.1} parent=5 // pred_check
      %p750 = pneg %p749
    $region46: #{double_conv_nchw.1} parent=5 // pred_check_branch
      %752 = sbr.rel (%p750) target = $region48
    $region47: #{double_conv_nchw.1} parent=5 // pred_region
      %s753 = ssub.s32 %s11, 2
      // Predicated region
      $region49: #{double_conv_nchw.1} parent=47 // pred_check
        %p754 = pneg %p150
      $region50: #{double_conv_nchw.1} parent=47 // pred_check_branch
        %756 = sbr.rel (%p754) target = $region52
      $region51: #{double_conv_nchw.1} parent=47 // pred_region
        %p757 = scmp.lt.s32.totalorder %s17, 1
        %s758 = scalar_select %p757, %s17, 1
        %s759 = smul.addr %s758, 2
        %s760 = smul.addr %s759, 8
        %s761 = scalar_lea.vmem %s5, %s760
      $region52: #{double_conv_nchw.1} parent=47 // pred_fallthru
        _
    $region48: #{double_conv_nchw.1} parent=5 // pred_fallthru
      _
  $region6: #{double_conv_nchw.1} parent=0 // loop_footer
    %s15 = sadd.s32 1, %s11
  $region7: #{double_conv_nchw.1} parent=0 // loop_footer_branch
    %10 = sbr.rel target = $region3
  $region8: #{double_conv_nchw.1} parent=0 // loop_exit
    _

</llo_original>
